<compile_context>
chip_gen: v7x
topology: tpu7x:2x2x1
jax: 0.10.0
libtpu: 0.0.40
codegen_flags: <defaults>
</compile_context>

<pallas_src>
import functools

import jax
import jax.numpy as jnp
from jax.experimental import pallas as pl
from jax.experimental.pallas import tpu as pltpu

LANE = 128
SUBLANE = 8


def _round_up(n, m):
    return ((n + m - 1) // m) * m


def _autoencoder_kernel(x_ref,
                        w1_ref, b1_ref,   # encoder Linear(input_dim, d_prime)
                        w2_ref, b2_ref,   # encoder Linear(d_prime, output_dim)
                        w3_ref, b3_ref,   # decoder Linear(output_dim, d_prime)
                        w4_ref, b4_ref,   # decoder Linear(d_prime, input_dim)
                        enc_ref, dec_ref):
    x = x_ref[...]

    # encoder: Linear -> ReLU -> Linear
    h1 = jnp.dot(x, w1_ref[...], preferred_element_type=jnp.float32) + b1_ref[...]
    h1 = jnp.maximum(h1, 0.0).astype(w2_ref.dtype)
    enc = jnp.dot(h1, w2_ref[...], preferred_element_type=jnp.float32) + b2_ref[...]
    enc_io = enc.astype(enc_ref.dtype)
    enc_ref[...] = enc_io

    # decoder: Linear -> ReLU -> Linear (consumes the stored-dtype bottleneck)
    h2 = jnp.dot(enc_io, w3_ref[...], preferred_element_type=jnp.float32) + b3_ref[...]
    h2 = jnp.maximum(h2, 0.0).astype(w4_ref.dtype)
    dec = jnp.dot(h2, w4_ref[...], preferred_element_type=jnp.float32) + b4_ref[...]
    dec_ref[...] = dec.astype(dec_ref.dtype)


@functools.partial(jax.jit, static_argnames=("block_b",))
def autoencoder_forward(x, params, *, block_b=512):
    """x: (B, input_dim). params: dict of pre-transposed (in, out) weights + (1, out) biases."""
    B, input_dim = x.shape
    d_prime = params["w1t"].shape[1]
    output_dim = params["w2t"].shape[1]

    # Lane-dense (128-padded) feature dims.
    in_p = _round_up(input_dim, LANE)
    dp_p = _round_up(d_prime, LANE)
    out_p = _round_up(output_dim, LANE)

    # Batch tile: large, multiple of 8; pad B up to a multiple of it (ragged-safe).
    bb = _round_up(max(SUBLANE, min(block_b, _round_up(B, SUBLANE))), SUBLANE)
    B_pad = _round_up(B, bb)
    grid_b = B_pad // bb

    def pad2(a, r, c):
        return jnp.pad(a, ((0, r - a.shape[0]), (0, c - a.shape[1])))

    x_p = pad2(x, B_pad, in_p)
    w1t = pad2(params["w1t"], in_p, dp_p); b1 = pad2(params["b1"], 1, dp_p)
    w2t = pad2(params["w2t"], dp_p, out_p); b2 = pad2(params["b2"], 1, out_p)
    w3t = pad2(params["w3t"], out_p, dp_p); b3 = pad2(params["b3"], 1, dp_p)
    w4t = pad2(params["w4t"], dp_p, in_p); b4 = pad2(params["b4"], 1, in_p)

    full = lambda i: (0, 0)                 # weights / biases: same block every step
    row = lambda i: (i, 0)                  # activations: tile over batch
    w_spec = lambda a: pl.BlockSpec(a.shape, full)

    # VMEM budget: resident (double-buffered) weights + activation tiles.
    p_item = jnp.dtype(w1t.dtype).itemsize
    x_item = jnp.dtype(x.dtype).itemsize
    w_bytes = (in_p * dp_p + dp_p * out_p + out_p * dp_p + dp_p * in_p
               + 2 * dp_p + out_p + in_p) * p_item
    act_bytes = bb * (2 * in_p + out_p) * x_item
    est_vmem = 2 * (w_bytes + act_bytes)    # default double-buffering on every spec
    cp = dict(dimension_semantics=("parallel",))   # shards grid steps across v7x's 2 TCs
    if est_vmem > (32 << 20):
        cp["vmem_limit_bytes"] = int(min(est_vmem * 1.25, 112 << 20))
    # NOTE: weights keep default double-buffering (tiny here); at large d_prime consider
    # pipeline_mode=pl.Buffered(1) on the weight specs (or per-layer K-tiling) to halve
    # the resident footprint on v7x's 64 MiB VMEM.

    enc_p, dec_p = pl.pallas_call(
        _autoencoder_kernel,
        out_shape=(
            jax.ShapeDtypeStruct((B_pad, out_p), x.dtype),
            jax.ShapeDtypeStruct((B_pad, in_p), x.dtype),
        ),
        grid_spec=pltpu.PrefetchScalarGridSpec(
            num_scalar_prefetch=0,
            grid=(grid_b,),
            in_specs=[
                pl.BlockSpec((bb, in_p), row),
                w_spec(w1t), w_spec(b1),
                w_spec(w2t), w_spec(b2),
                w_spec(w3t), w_spec(b3),
                w_spec(w4t), w_spec(b4),
            ],
            out_specs=[
                pl.BlockSpec((bb, out_p), row),
                pl.BlockSpec((bb, in_p), row),
            ],
        ),
        compiler_params=pltpu.CompilerParams(**cp),
    )(x_p, w1t, b1, w2t, b2, w3t, b3, w4t, b4)

    return enc_p[:B, :output_dim], dec_p[:B, :input_dim]


def init_params(key, input_dim, output_dim, dtype=jnp.float32):
    """Deterministic init mimicking nn.Linear's uniform(-1/sqrt(fan_in), 1/sqrt(fan_in)).
    Weights are stored pre-transposed as (in_features, out_features)."""
    d_prime = input_dim

    def linear(k, fan_in, fan_out):
        kw, kb = jax.random.split(k)
        bound = 1.0 / jnp.sqrt(fan_in)
        w_t = jax.random.uniform(kw, (fan_in, fan_out), dtype, -bound, bound)
        b = jax.random.uniform(kb, (1, fan_out), dtype, -bound, bound)
        return w_t, b

    k1, k2, k3, k4 = jax.random.split(key, 4)
    w1t, b1 = linear(k1, input_dim, d_prime)      # encoder[0]
    w2t, b2 = linear(k2, d_prime, output_dim)     # encoder[2]
    w3t, b3 = linear(k3, output_dim, d_prime)     # decoder[0]
    w4t, b4 = linear(k4, d_prime, input_dim)      # decoder[2]
    return dict(w1t=w1t, b1=b1, w2t=w2t, b2=b2, w3t=w3t, b3=b3, w4t=w4t, b4=b4)


def reference_forward(x, p):
    h1 = jnp.maximum(x @ p["w1t"] + p["b1"], 0.0)
    enc = h1 @ p["w2t"] + p["b2"]
    h2 = jnp.maximum(enc @ p["w3t"] + p["b3"], 0.0)
    dec = h2 @ p["w4t"] + p["b4"]
    return enc, dec


if __name__ == "__main__":
    key = jax.random.PRNGKey(0)
    kx, kx2, kp = jax.random.split(key, 3)

    batch, input_dim, output_dim = 16, 32, 8
    x = jax.random.normal(kx, (batch, input_dim), jnp.float32)
    params = init_params(kp, input_dim, output_dim)

    # main run (default large-tile path)
    enc, dec = autoencoder_forward(x, params)
    jax.block_until_ready((enc, dec))
    enc_ref, dec_ref = reference_forward(x, params)
    assert enc.shape == (batch, output_dim) and dec.shape == (batch, input_dim)
    assert jnp.allclose(enc, enc_ref, atol=1e-5, rtol=1e-5)
    assert jnp.allclose(dec, dec_ref, atol=1e-5, rtol=1e-5)

    # ragged-batch run (exercises batch padding / masking-free path)
    xr = jax.random.normal(kx2, (13, input_dim), jnp.float32)
    enc_r, dec_r = autoencoder_forward(xr, params, block_b=8)
    jax.block_until_ready((enc_r, dec_r))
    enc_rr, dec_rr = reference_forward(xr, params)
    assert enc_r.shape == (13, output_dim) and dec_r.shape == (13, input_dim)
    assert jnp.allclose(enc_r, enc_rr, atol=1e-5, rtol=1e-5)
    assert jnp.allclose(dec_r, dec_rr, atol=1e-5, rtol=1e-5)

    print("KERNEL_OK")
</pallas_src>

<mosaic_0001>
module attributes {stable_mosaic.version = 11 : i64} {
  func.func @_autoencoder_kernel(%arg0: i32, %arg1: memref<16x128xf32, #tpu.memory_space<vmem>>, %arg2: memref<128x128xf32, #tpu.memory_space<vmem>>, %arg3: memref<1x128xf32, #tpu.memory_space<vmem>>, %arg4: memref<128x128xf32, #tpu.memory_space<vmem>>, %arg5: memref<1x128xf32, #tpu.memory_space<vmem>>, %arg6: memref<128x128xf32, #tpu.memory_space<vmem>>, %arg7: memref<1x128xf32, #tpu.memory_space<vmem>>, %arg8: memref<128x128xf32, #tpu.memory_space<vmem>>, %arg9: memref<1x128xf32, #tpu.memory_space<vmem>>, %arg10: memref<16x128xf32, #tpu.memory_space<vmem>>, %arg11: memref<16x128xf32, #tpu.memory_space<vmem>>) attributes {dimension_semantics = [#tpu.dimension_semantics<parallel>], iteration_bounds = array<i64: 1>, scalar_prefetch = 0 : i64, scratch_operands = 0 : i64, tpu.core_type = #tpu.core_type<tc>, window_params = [{transform_indices = @transform_0, window_bounds = array<i64: 16, 128>}, {pipeline_mode = #tpu.pipeline_mode<synchronous>, transform_indices = @transform_1, window_bounds = array<i64: 128, 128>}, {pipeline_mode = #tpu.pipeline_mode<synchronous>, transform_indices = @transform_2, window_bounds = array<i64: 1, 128>}, {pipeline_mode = #tpu.pipeline_mode<synchronous>, transform_indices = @transform_3, window_bounds = array<i64: 128, 128>}, {pipeline_mode = #tpu.pipeline_mode<synchronous>, transform_indices = @transform_4, window_bounds = array<i64: 1, 128>}, {pipeline_mode = #tpu.pipeline_mode<synchronous>, transform_indices = @transform_5, window_bounds = array<i64: 128, 128>}, {pipeline_mode = #tpu.pipeline_mode<synchronous>, transform_indices = @transform_6, window_bounds = array<i64: 1, 128>}, {pipeline_mode = #tpu.pipeline_mode<synchronous>, transform_indices = @transform_7, window_bounds = array<i64: 128, 128>}, {pipeline_mode = #tpu.pipeline_mode<synchronous>, transform_indices = @transform_8, window_bounds = array<i64: 1, 128>}, {transform_indices = @transform_9, window_bounds = array<i64: 16, 128>}, {transform_indices = @transform_10, window_bounds = array<i64: 16, 128>}]} {
    %c0 = arith.constant 0 : index
    %c0_0 = arith.constant 0 : index
    %0 = vector.load %arg1[%c0, %c0_0] : memref<16x128xf32, #tpu.memory_space<vmem>>, vector<16x128xf32>
    %c0_1 = arith.constant 0 : index
    %c0_2 = arith.constant 0 : index
    %1 = vector.load %arg2[%c0_1, %c0_2] : memref<128x128xf32, #tpu.memory_space<vmem>>, vector<128x128xf32>
    %cst = arith.constant dense<0.000000e+00> : vector<16x128xf32>
    %2 = tpu.matmul %0, %1, %cst {dimension_numbers = #tpu.dot_dimension_numbers<[1], [0], [0], [1], [0, 0, 1, 1], [], []>} : vector<16x128xf32>, vector<128x128xf32>, vector<16x128xf32> -> vector<16x128xf32>
    %c0_3 = arith.constant 0 : index
    %c0_4 = arith.constant 0 : index
    %3 = vector.load %arg3[%c0_3, %c0_4] : memref<1x128xf32, #tpu.memory_space<vmem>>, vector<1x128xf32>
    %4 = vector.broadcast %3 : vector<1x128xf32> to vector<16x128xf32>
    %5 = arith.addf %2, %4 : vector<16x128xf32>
    %cst_5 = arith.constant 0.000000e+00 : f32
    %6 = vector.broadcast %cst_5 : f32 to vector<16x128xf32>
    %7 = arith.maximumf %5, %6 : vector<16x128xf32>
    %c0_6 = arith.constant 0 : index
    %c0_7 = arith.constant 0 : index
    %8 = vector.load %arg4[%c0_6, %c0_7] : memref<128x128xf32, #tpu.memory_space<vmem>>, vector<128x128xf32>
    %cst_8 = arith.constant dense<0.000000e+00> : vector<16x128xf32>
    %9 = tpu.matmul %7, %8, %cst_8 {dimension_numbers = #tpu.dot_dimension_numbers<[1], [0], [0], [1], [0, 0, 1, 1], [], []>} : vector<16x128xf32>, vector<128x128xf32>, vector<16x128xf32> -> vector<16x128xf32>
    %c0_9 = arith.constant 0 : index
    %c0_10 = arith.constant 0 : index
    %10 = vector.load %arg5[%c0_9, %c0_10] : memref<1x128xf32, #tpu.memory_space<vmem>>, vector<1x128xf32>
    %11 = vector.broadcast %10 : vector<1x128xf32> to vector<16x128xf32>
    %12 = arith.addf %9, %11 : vector<16x128xf32>
    %c0_11 = arith.constant 0 : index
    %c0_12 = arith.constant 0 : index
    %13 = vector.load %arg10[%c0_11, %c0_12] : memref<16x128xf32, #tpu.memory_space<vmem>>, vector<16x128xf32>
    tpu.vector_store %arg10[%c0_11, %c0_12], %12 {strides = array<i32>} : memref<16x128xf32, #tpu.memory_space<vmem>>, vector<16x128xf32>,
    %c0_13 = arith.constant 0 : index
    %c0_14 = arith.constant 0 : index
    %14 = vector.load %arg6[%c0_13, %c0_14] : memref<128x128xf32, #tpu.memory_space<vmem>>, vector<128x128xf32>
    %cst_15 = arith.constant dense<0.000000e+00> : vector<16x128xf32>
    %15 = tpu.matmul %12, %14, %cst_15 {dimension_numbers = #tpu.dot_dimension_numbers<[1], [0], [0], [1], [0, 0, 1, 1], [], []>} : vector<16x128xf32>, vector<128x128xf32>, vector<16x128xf32> -> vector<16x128xf32>
    %c0_16 = arith.constant 0 : index
    %c0_17 = arith.constant 0 : index
    %16 = vector.load %arg7[%c0_16, %c0_17] : memref<1x128xf32, #tpu.memory_space<vmem>>, vector<1x128xf32>
    %17 = vector.broadcast %16 : vector<1x128xf32> to vector<16x128xf32>
    %18 = arith.addf %15, %17 : vector<16x128xf32>
    %cst_18 = arith.constant 0.000000e+00 : f32
    %19 = vector.broadcast %cst_18 : f32 to vector<16x128xf32>
    %20 = arith.maximumf %18, %19 : vector<16x128xf32>
    %c0_19 = arith.constant 0 : index
    %c0_20 = arith.constant 0 : index
    %21 = vector.load %arg8[%c0_19, %c0_20] : memref<128x128xf32, #tpu.memory_space<vmem>>, vector<128x128xf32>
    %cst_21 = arith.constant dense<0.000000e+00> : vector<16x128xf32>
    %22 = tpu.matmul %20, %21, %cst_21 {dimension_numbers = #tpu.dot_dimension_numbers<[1], [0], [0], [1], [0, 0, 1, 1], [], []>} : vector<16x128xf32>, vector<128x128xf32>, vector<16x128xf32> -> vector<16x128xf32>
    %c0_22 = arith.constant 0 : index
    %c0_23 = arith.constant 0 : index
    %23 = vector.load %arg9[%c0_22, %c0_23] : memref<1x128xf32, #tpu.memory_space<vmem>>, vector<1x128xf32>
    %24 = vector.broadcast %23 : vector<1x128xf32> to vector<16x128xf32>
    %25 = arith.addf %22, %24 : vector<16x128xf32>
    %c0_24 = arith.constant 0 : index
    %c0_25 = arith.constant 0 : index
    %26 = vector.load %arg11[%c0_24, %c0_25] : memref<16x128xf32, #tpu.memory_space<vmem>>, vector<16x128xf32>
    tpu.vector_store %arg11[%c0_24, %c0_25], %25 {strides = array<i32>} : memref<16x128xf32, #tpu.memory_space<vmem>>, vector<16x128xf32>,
    return
  }
  func.func @transform_0(%arg0: i32) -> (i32, i32) {
    %c0_i32 = arith.constant 0 : i32
    %c0_i32_0 = arith.constant 0 : i32
    return %arg0, %c0_i32 : i32, i32
  }
  func.func @transform_1(%arg0: i32) -> (i32, i32) {
    %c0_i32 = arith.constant 0 : i32
    %c0_i32_0 = arith.constant 0 : i32
    %c0_i32_1 = arith.constant 0 : i32
    return %c0_i32, %c0_i32_0 : i32, i32
  }
  func.func @transform_2(%arg0: i32) -> (i32, i32) {
    %c0_i32 = arith.constant 0 : i32
    %c0_i32_0 = arith.constant 0 : i32
    %c0_i32_1 = arith.constant 0 : i32
    return %c0_i32, %c0_i32_0 : i32, i32
  }
  func.func @transform_3(%arg0: i32) -> (i32, i32) {
    %c0_i32 = arith.constant 0 : i32
    %c0_i32_0 = arith.constant 0 : i32
    %c0_i32_1 = arith.constant 0 : i32
    return %c0_i32, %c0_i32_0 : i32, i32
  }
  func.func @transform_4(%arg0: i32) -> (i32, i32) {
    %c0_i32 = arith.constant 0 : i32
    %c0_i32_0 = arith.constant 0 : i32
    %c0_i32_1 = arith.constant 0 : i32
    return %c0_i32, %c0_i32_0 : i32, i32
  }
  func.func @transform_5(%arg0: i32) -> (i32, i32) {
    %c0_i32 = arith.constant 0 : i32
    %c0_i32_0 = arith.constant 0 : i32
    %c0_i32_1 = arith.constant 0 : i32
    return %c0_i32, %c0_i32_0 : i32, i32
  }
  func.func @transform_6(%arg0: i32) -> (i32, i32) {
    %c0_i32 = arith.constant 0 : i32
    %c0_i32_0 = arith.constant 0 : i32
    %c0_i32_1 = arith.constant 0 : i32
    return %c0_i32, %c0_i32_0 : i32, i32
  }
  func.func @transform_7(%arg0: i32) -> (i32, i32) {
    %c0_i32 = arith.constant 0 : i32
    %c0_i32_0 = arith.constant 0 : i32
    %c0_i32_1 = arith.constant 0 : i32
    return %c0_i32, %c0_i32_0 : i32, i32
  }
  func.func @transform_8(%arg0: i32) -> (i32, i32) {
    %c0_i32 = arith.constant 0 : i32
    %c0_i32_0 = arith.constant 0 : i32
    %c0_i32_1 = arith.constant 0 : i32
    return %c0_i32, %c0_i32_0 : i32, i32
  }
  func.func @transform_9(%arg0: i32) -> (i32, i32) {
    %c0_i32 = arith.constant 0 : i32
    %c0_i32_0 = arith.constant 0 : i32
    return %arg0, %c0_i32 : i32, i32
  }
  func.func @transform_10(%arg0: i32) -> (i32, i32) {
    %c0_i32 = arith.constant 0 : i32
    %c0_i32_0 = arith.constant 0 : i32
    return %arg0, %c0_i32 : i32, i32
  }
}

</mosaic_0001>

<llo_original>
// kernel: autoencoder_forward.1
$region0: #{autoencoder_forward.1}
  #allocation0 [shape = 'u32[]', space=smem, size = 0x4, offset = 0x4, fixed_abs, tag = 'smem constant byte address 0x4 - core index']
  #allocation1 [shape = 'u32[144,128]{1,0:T(1,128)}', space=vmem, size = 0x12000, scoped, tag = 'internal scratch']
  %s0 = inlined_call_operand.vmem [shape: f32[16,128], index: 0, kind: input, shape index: {}]
  %s1 = inlined_call_operand.vmem [shape: f32[128,128], index: 1, kind: input, shape index: {}]
  %s2 = inlined_call_operand.vmem [shape: f32[1,128], index: 2, kind: input, shape index: {}]
  %s3 = inlined_call_operand.vmem [shape: f32[128,128], index: 3, kind: input, shape index: {}]
  %s4 = inlined_call_operand.vmem [shape: f32[1,128], index: 4, kind: input, shape index: {}]
  %s5 = inlined_call_operand.vmem [shape: f32[128,128], index: 5, kind: input, shape index: {}]
  %s6 = inlined_call_operand.vmem [shape: f32[1,128], index: 6, kind: input, shape index: {}]
  %s7 = inlined_call_operand.vmem [shape: f32[128,128], index: 7, kind: input, shape index: {}]
  %s8 = inlined_call_operand.vmem [shape: f32[1,128], index: 8, kind: input, shape index: {}]
  %s9 = inlined_call_operand.vmem [shape: f32[16,128], index: 9, kind: output, shape index: {0}]
  %s10 = inlined_call_operand.hbm [shape: f32[16,128], index: 10, kind: output, shape index: {1}]
  %11 = xla_tuple %s9, %s10
  %s12 = sld [smem:[#allocation0]]
  $region54: #{autoencoder_forward.1} parent=0
    _
  %s14 = ssub.s32 1, %s12
  %s15 = scalar_select 0, %s14, %s12
  $region1: #{autoencoder_forward.1} parent=0
    #allocation2 [shape = 'u8[8192]{0}', space=vmem, size = 0x2000, scoped, tag = 'output window, operand 1, single buffered']
    #allocation3 [shape = 's32[1]{0}', space=sflag, size = 0x4, scoped, tag = 'scoped memory for autoencoder_forward.1']
    %16 = vsyncpa [#allocation3], 0
    // Predicated region
    $region2: #{autoencoder_forward.1} parent=1 // pred_check
      _
    $region3: #{autoencoder_forward.1} parent=1 // pred_check_branch
      %18 = sbr.rel (0) target = $region5
    $region4: #{autoencoder_forward.1} parent=1 // pred_region
      _
    $region5: #{autoencoder_forward.1} parent=1 // pred_fallthru
      _
    // Predicated region
    $region6: #{autoencoder_forward.1} parent=1 // pred_check
      _
    $region7: #{autoencoder_forward.1} parent=1 // pred_check_branch
      %20 = sbr.rel (0) target = $region9
    $region8: #{autoencoder_forward.1} parent=1 // pred_region
      _
    $region9: #{autoencoder_forward.1} parent=1 // pred_fallthru
      _
    // Predicated region
    $region10: #{autoencoder_forward.1} parent=1 // pred_check
      _
    $region11: #{autoencoder_forward.1} parent=1 // pred_check_branch
      %22 = sbr.rel (0) target = $region13
    $region12: #{autoencoder_forward.1} parent=1 // pred_region
      _
    $region13: #{autoencoder_forward.1} parent=1 // pred_fallthru
      _
    // Predicated region
    $region14: #{autoencoder_forward.1} parent=1 // pred_check
      _
    $region15: #{autoencoder_forward.1} parent=1 // pred_check_branch
      %24 = sbr.rel (0) target = $region17
    $region16: #{autoencoder_forward.1} parent=1 // pred_region
      _
    $region17: #{autoencoder_forward.1} parent=1 // pred_fallthru
      _
    // Predicated region
    $region18: #{autoencoder_forward.1} parent=1 // pred_check
      _
    $region19: #{autoencoder_forward.1} parent=1 // pred_check_branch
      %26 = sbr.rel (0) target = $region21
    $region20: #{autoencoder_forward.1} parent=1 // pred_region
      _
    $region21: #{autoencoder_forward.1} parent=1 // pred_fallthru
      _
    // Predicated region
    $region22: #{autoencoder_forward.1} parent=1 // pred_check
      _
    $region23: #{autoencoder_forward.1} parent=1 // pred_check_branch
      %28 = sbr.rel (0) target = $region25
    $region24: #{autoencoder_forward.1} parent=1 // pred_region
      _
    $region25: #{autoencoder_forward.1} parent=1 // pred_fallthru
      _
    // Predicated region
    $region26: #{autoencoder_forward.1} parent=1 // pred_check
      _
    $region27: #{autoencoder_forward.1} parent=1 // pred_check_branch
      %30 = sbr.rel (0) target = $region29
    $region28: #{autoencoder_forward.1} parent=1 // pred_region
      _
    $region29: #{autoencoder_forward.1} parent=1 // pred_fallthru
      _
    // Predicated region
    $region30: #{autoencoder_forward.1} parent=1 // pred_check
      _
    $region31: #{autoencoder_forward.1} parent=1 // pred_check_branch
      %32 = sbr.rel (0) target = $region33
    $region32: #{autoencoder_forward.1} parent=1 // pred_region
      _
    $region33: #{autoencoder_forward.1} parent=1 // pred_fallthru
      _
    // Predicated region
    $region34: #{autoencoder_forward.1} parent=1 // pred_check
      _
    $region35: #{autoencoder_forward.1} parent=1 // pred_check_branch
      %34 = sbr.rel (0) target = $region37
    $region36: #{autoencoder_forward.1} parent=1 // pred_region
      _
    $region37: #{autoencoder_forward.1} parent=1 // pred_fallthru
      _
    %v35 = vld [vmem:[%s0] sm:$0xff]
    %v36 = vld [vmem:[%s0 + $0x8] sm:$0xff]
    %v37 = vld [vmem:[%s1] sm:$0xff]
    %v38 = vld [vmem:[%s1 + $0x8] sm:$0xff]
    %v39 = vld [vmem:[%s1 + $0x10] sm:$0xff]
    %v40 = vld [vmem:[%s1 + $0x18] sm:$0xff]
    %v41 = vld [vmem:[%s1 + $0x20] sm:$0xff]
    %v42 = vld [vmem:[%s1 + $0x28] sm:$0xff]
    %v43 = vld [vmem:[%s1 + $0x30] sm:$0xff]
    %v44 = vld [vmem:[%s1 + $0x38] sm:$0xff]
    %v45 = vld [vmem:[%s1 + $0x40] sm:$0xff]
    %v46 = vld [vmem:[%s1 + $0x48] sm:$0xff]
    %v47 = vld [vmem:[%s1 + $0x50] sm:$0xff]
    %v48 = vld [vmem:[%s1 + $0x58] sm:$0xff]
    %v49 = vld [vmem:[%s1 + $0x60] sm:$0xff]
    %v50 = vld [vmem:[%s1 + $0x68] sm:$0xff]
    %v51 = vld [vmem:[%s1 + $0x70] sm:$0xff]
    %v52 = vld [vmem:[%s1 + $0x78] sm:$0xff]
    %v53 = vld [vmem:[%s2] sm:$0x1]
    %v55 = vlaneseq
    %v56 = vshrl.u32 %v55, 7
    %v57 = vsub.s32 0, %v56
    %v58 = vrot.slane %v53, %v57
    %60 = vmatprep.subr.mxu0 0.0
    %61 = vmatpush1.msra.mxu0 %v37
    %62 = vmatprep.subr.mxu0 0.0
    %63 = vmatpush1.msra.mxu0 %v38
    %64 = vmatprep.subr.mxu0 0.0
    %65 = vmatpush1.msra.mxu0 %v39
    %66 = vmatprep.subr.mxu0 0.0
    %67 = vmatpush1.msra.mxu0 %v40
    %68 = vmatprep.subr.mxu0 0.0
    %69 = vmatpush1.msra.mxu0 %v41
    %70 = vmatprep.subr.mxu0 0.0
    %71 = vmatpush1.msra.mxu0 %v42
    %72 = vmatprep.subr.mxu0 0.0
    %73 = vmatpush1.msra.mxu0 %v43
    %74 = vmatprep.subr.mxu0 0.0
    %75 = vmatpush1.msra.mxu0 %v44
    %76 = vmatprep.subr.mxu0 0.0
    %77 = vmatpush1.msra.mxu0 %v45
    %78 = vmatprep.subr.mxu0 0.0
    %79 = vmatpush1.msra.mxu0 %v46
    %80 = vmatprep.subr.mxu0 0.0
    %81 = vmatpush1.msra.mxu0 %v47
    %82 = vmatprep.subr.mxu0 0.0
    %83 = vmatpush1.msra.mxu0 %v48
    %84 = vmatprep.subr.mxu0 0.0
    %85 = vmatpush1.msra.mxu0 %v49
    %86 = vmatprep.subr.mxu0 0.0
    %87 = vmatpush1.msra.mxu0 %v50
    %88 = vmatprep.subr.mxu0 0.0
    %89 = vmatpush1.msra.mxu0 %v51
    %90 = vmatprep.subr.mxu0 0.0
    %91 = vmatpush1.msra.mxu0 %v52
    %92 = vmatprep.subr.mxu0 0.0
    %93 = vmatpush1.msra.mxu0 0.0
    %94 = vmatprep.subr.mxu0 0.0
    %95 = vmatpush1.msra.mxu0 0.0
    %96 = vmatprep.subr.mxu0 0.0
    %97 = vmatpush1.msra.mxu0 0.0
    %98 = vmatprep.subr.mxu0 0.0
    %99 = vmatpush1.msra.mxu0 0.0
    %100 = vmatprep.subr.mxu0 0.0
    %101 = vmatpush1.msra.mxu0 0.0
    %102 = vmatprep.subr.mxu0 0.0
    %103 = vmatpush1.msra.mxu0 0.0
    %104 = vmatprep.subr.mxu0 0.0
    %105 = vmatpush1.msra.mxu0 0.0
    %106 = vmatprep.subr.mxu0 0.0
    %107 = vmatpush1.msra.mxu0 0.0
    %108 = vmatprep.subr.mxu0 0.0
    %109 = vmatpush1.msra.mxu0 0.0
    %110 = vmatprep.subr.mxu0 0.0
    %111 = vmatpush1.msra.mxu0 0.0
    %112 = vmatprep.subr.mxu0 0.0
    %113 = vmatpush1.msra.mxu0 0.0
    %114 = vmatprep.subr.mxu0 0.0
    %115 = vmatpush1.msra.mxu0 0.0
    %116 = vmatprep.subr.mxu0 0.0
    %117 = vmatpush1.msra.mxu0 0.0
    %118 = vmatprep.subr.mxu0 0.0
    %119 = vmatpush1.msra.mxu0 0.0
    %120 = vmatprep.subr.mxu0 0.0
    %121 = vmatpush1.msra.mxu0 0.0
    %122 = vmatprep.subr.mxu0 0.0
    %123 = vmatpush1.msra.mxu0 0.0
    %124 = vmatprep.mubr.f32.mxu0 0.0
    %125 = vmatmul.mubr.f32.gmra.mrb[0].mxu0 %v35
    %v126 = vpop.f32.mrb[0].mxu0
    %v127 = vadd.f32 %v58, %v126
    %v128 = vpop.f32.mrb[0].mxu0
    %129 = vmatprep.mubr.f32.mxu0 0.0
    %130 = vmatmul.mubr.f32.gmra.mrb[0].mxu0 %v36
    %v131 = vpop.f32.mrb[0].mxu0
    %v132 = vadd.f32 %v58, %v131
    %v133 = vpop.f32.mrb[0].mxu0
    %134 = vdwg.mxu0
    %v135 = vmax.f32 %v127, 0.0
    %v136 = vmax.f32 %v132, 0.0
    %v137 = vld [vmem:[%s3] sm:$0xff]
    %v138 = vld [vmem:[%s3 + $0x8] sm:$0xff]
    %v139 = vld [vmem:[%s3 + $0x10] sm:$0xff]
    %v140 = vld [vmem:[%s3 + $0x18] sm:$0xff]
    %v141 = vld [vmem:[%s3 + $0x20] sm:$0xff]
    %v142 = vld [vmem:[%s3 + $0x28] sm:$0xff]
    %v143 = vld [vmem:[%s3 + $0x30] sm:$0xff]
    %v144 = vld [vmem:[%s3 + $0x38] sm:$0xff]
    %v145 = vld [vmem:[%s3 + $0x40] sm:$0xff]
    %v146 = vld [vmem:[%s3 + $0x48] sm:$0xff]
    %v147 = vld [vmem:[%s3 + $0x50] sm:$0xff]
    %v148 = vld [vmem:[%s3 + $0x58] sm:$0xff]
    %v149 = vld [vmem:[%s3 + $0x60] sm:$0xff]
    %v150 = vld [vmem:[%s3 + $0x68] sm:$0xff]
    %v151 = vld [vmem:[%s3 + $0x70] sm:$0xff]
    %v152 = vld [vmem:[%s3 + $0x78] sm:$0xff]
    %v153 = vld [vmem:[%s4] sm:$0x1]
    %v155 = vlaneseq
    %v156 = vshrl.u32 %v155, 7
    %v157 = vsub.s32 0, %v156
    %v158 = vrot.slane %v153, %v157
    %160 = vmatprep.subr.mxu0 0.0
    %161 = vmatpush1.msra.mxu0 %v137
    %162 = vmatprep.subr.mxu0 0.0
    %163 = vmatpush1.msra.mxu0 %v138
    %164 = vmatprep.subr.mxu0 0.0
    %165 = vmatpush1.msra.mxu0 %v139
    %166 = vmatprep.subr.mxu0 0.0
    %167 = vmatpush1.msra.mxu0 %v140
    %168 = vmatprep.subr.mxu0 0.0
    %169 = vmatpush1.msra.mxu0 %v141
    %170 = vmatprep.subr.mxu0 0.0
    %171 = vmatpush1.msra.mxu0 %v142
    %172 = vmatprep.subr.mxu0 0.0
    %173 = vmatpush1.msra.mxu0 %v143
    %174 = vmatprep.subr.mxu0 0.0
    %175 = vmatpush1.msra.mxu0 %v144
    %176 = vmatprep.subr.mxu0 0.0
    %177 = vmatpush1.msra.mxu0 %v145
    %178 = vmatprep.subr.mxu0 0.0
    %179 = vmatpush1.msra.mxu0 %v146
    %180 = vmatprep.subr.mxu0 0.0
    %181 = vmatpush1.msra.mxu0 %v147
    %182 = vmatprep.subr.mxu0 0.0
    %183 = vmatpush1.msra.mxu0 %v148
    %184 = vmatprep.subr.mxu0 0.0
    %185 = vmatpush1.msra.mxu0 %v149
    %186 = vmatprep.subr.mxu0 0.0
    %187 = vmatpush1.msra.mxu0 %v150
    %188 = vmatprep.subr.mxu0 0.0
    %189 = vmatpush1.msra.mxu0 %v151
    %190 = vmatprep.subr.mxu0 0.0
    %191 = vmatpush1.msra.mxu0 %v152
    %192 = vmatprep.subr.mxu0 0.0
    %193 = vmatpush1.msra.mxu0 0.0
    %194 = vmatprep.subr.mxu0 0.0
    %195 = vmatpush1.msra.mxu0 0.0
    %196 = vmatprep.subr.mxu0 0.0
    %197 = vmatpush1.msra.mxu0 0.0
    %198 = vmatprep.subr.mxu0 0.0
    %199 = vmatpush1.msra.mxu0 0.0
    %200 = vmatprep.subr.mxu0 0.0
    %201 = vmatpush1.msra.mxu0 0.0
    %202 = vmatprep.subr.mxu0 0.0
    %203 = vmatpush1.msra.mxu0 0.0
    %204 = vmatprep.subr.mxu0 0.0
    %205 = vmatpush1.msra.mxu0 0.0
    %206 = vmatprep.subr.mxu0 0.0
    %207 = vmatpush1.msra.mxu0 0.0
    %208 = vmatprep.subr.mxu0 0.0
    %209 = vmatpush1.msra.mxu0 0.0
    %210 = vmatprep.subr.mxu0 0.0
    %211 = vmatpush1.msra.mxu0 0.0
    %212 = vmatprep.subr.mxu0 0.0
    %213 = vmatpush1.msra.mxu0 0.0
    %214 = vmatprep.subr.mxu0 0.0
    %215 = vmatpush1.msra.mxu0 0.0
    %216 = vmatprep.subr.mxu0 0.0
    %217 = vmatpush1.msra.mxu0 0.0
    %218 = vmatprep.subr.mxu0 0.0
    %219 = vmatpush1.msra.mxu0 0.0
    %220 = vmatprep.subr.mxu0 0.0
    %221 = vmatpush1.msra.mxu0 0.0
    %222 = vmatprep.subr.mxu0 0.0
    %223 = vmatpush1.msra.mxu0 0.0
    %224 = vmatprep.mubr.f32.mxu0 0.0
    %225 = vmatmul.mubr.f32.gmra.mrb[0].mxu0 %v135
    %v226 = vpop.f32.mrb[0].mxu0
    %v227 = vadd.f32 %v158, %v226
    %v228 = vpop.f32.mrb[0].mxu0
    %229 = vmatprep.mubr.f32.mxu0 0.0
    %230 = vmatmul.mubr.f32.gmra.mrb[0].mxu0 %v136
    %v231 = vpop.f32.mrb[0].mxu0
    %v232 = vadd.f32 %v158, %v231
    %v233 = vpop.f32.mrb[0].mxu0
    %234 = vdwg.mxu0
    %235 = vst [vmem:[%s9] sm:$0xff] %v227
    %236 = vst [vmem:[%s9 + $0x8] sm:$0xff] %v232
    %v237 = vld [vmem:[%s5] sm:$0xff]
    %v238 = vld [vmem:[%s5 + $0x8] sm:$0xff]
    %v239 = vld [vmem:[%s5 + $0x10] sm:$0xff]
    %v240 = vld [vmem:[%s5 + $0x18] sm:$0xff]
    %v241 = vld [vmem:[%s5 + $0x20] sm:$0xff]
    %v242 = vld [vmem:[%s5 + $0x28] sm:$0xff]
    %v243 = vld [vmem:[%s5 + $0x30] sm:$0xff]
    %v244 = vld [vmem:[%s5 + $0x38] sm:$0xff]
    %v245 = vld [vmem:[%s5 + $0x40] sm:$0xff]
    %v246 = vld [vmem:[%s5 + $0x48] sm:$0xff]
    %v247 = vld [vmem:[%s5 + $0x50] sm:$0xff]
    %v248 = vld [vmem:[%s5 + $0x58] sm:$0xff]
    %v249 = vld [vmem:[%s5 + $0x60] sm:$0xff]
    %v250 = vld [vmem:[%s5 + $0x68] sm:$0xff]
    %v251 = vld [vmem:[%s5 + $0x70] sm:$0xff]
    %v252 = vld [vmem:[%s5 + $0x78] sm:$0xff]
    %v253 = vld [vmem:[%s6] sm:$0x1]
    %v255 = vlaneseq
    %v256 = vshrl.u32 %v255, 7
    %v257 = vsub.s32 0, %v256
    %v258 = vrot.slane %v253, %v257
    %260 = vmatprep.subr.mxu0 0.0
    %261 = vmatpush1.msra.mxu0 %v237
    %262 = vmatprep.subr.mxu0 0.0
    %263 = vmatpush1.msra.mxu0 %v238
    %264 = vmatprep.subr.mxu0 0.0
    %265 = vmatpush1.msra.mxu0 %v239
    %266 = vmatprep.subr.mxu0 0.0
    %267 = vmatpush1.msra.mxu0 %v240
    %268 = vmatprep.subr.mxu0 0.0
    %269 = vmatpush1.msra.mxu0 %v241
    %270 = vmatprep.subr.mxu0 0.0
    %271 = vmatpush1.msra.mxu0 %v242
    %272 = vmatprep.subr.mxu0 0.0
    %273 = vmatpush1.msra.mxu0 %v243
    %274 = vmatprep.subr.mxu0 0.0
    %275 = vmatpush1.msra.mxu0 %v244
    %276 = vmatprep.subr.mxu0 0.0
    %277 = vmatpush1.msra.mxu0 %v245
    %278 = vmatprep.subr.mxu0 0.0
    %279 = vmatpush1.msra.mxu0 %v246
    %280 = vmatprep.subr.mxu0 0.0
    %281 = vmatpush1.msra.mxu0 %v247
    %282 = vmatprep.subr.mxu0 0.0
    %283 = vmatpush1.msra.mxu0 %v248
    %284 = vmatprep.subr.mxu0 0.0
    %285 = vmatpush1.msra.mxu0 %v249
    %286 = vmatprep.subr.mxu0 0.0
    %287 = vmatpush1.msra.mxu0 %v250
    %288 = vmatprep.subr.mxu0 0.0
    %289 = vmatpush1.msra.mxu0 %v251
    %290 = vmatprep.subr.mxu0 0.0
    %291 = vmatpush1.msra.mxu0 %v252
    %292 = vmatprep.subr.mxu0 0.0
    %293 = vmatpush1.msra.mxu0 0.0
    %294 = vmatprep.subr.mxu0 0.0
    %295 = vmatpush1.msra.mxu0 0.0
    %296 = vmatprep.subr.mxu0 0.0
    %297 = vmatpush1.msra.mxu0 0.0
    %298 = vmatprep.subr.mxu0 0.0
    %299 = vmatpush1.msra.mxu0 0.0
    %300 = vmatprep.subr.mxu0 0.0
    %301 = vmatpush1.msra.mxu0 0.0
    %302 = vmatprep.subr.mxu0 0.0
    %303 = vmatpush1.msra.mxu0 0.0
    %304 = vmatprep.subr.mxu0 0.0
    %305 = vmatpush1.msra.mxu0 0.0
    %306 = vmatprep.subr.mxu0 0.0
    %307 = vmatpush1.msra.mxu0 0.0
    %308 = vmatprep.subr.mxu0 0.0
    %309 = vmatpush1.msra.mxu0 0.0
    %310 = vmatprep.subr.mxu0 0.0
    %311 = vmatpush1.msra.mxu0 0.0
    %312 = vmatprep.subr.mxu0 0.0
    %313 = vmatpush1.msra.mxu0 0.0
    %314 = vmatprep.subr.mxu0 0.0
    %315 = vmatpush1.msra.mxu0 0.0
    %316 = vmatprep.subr.mxu0 0.0
    %317 = vmatpush1.msra.mxu0 0.0
    %318 = vmatprep.subr.mxu0 0.0
    %319 = vmatpush1.msra.mxu0 0.0
    %320 = vmatprep.subr.mxu0 0.0
    %321 = vmatpush1.msra.mxu0 0.0
    %322 = vmatprep.subr.mxu0 0.0
    %323 = vmatpush1.msra.mxu0 0.0
    %324 = vmatprep.mubr.f32.mxu0 0.0
    %325 = vmatmul.mubr.f32.gmra.mrb[0].mxu0 %v227
    %v326 = vpop.f32.mrb[0].mxu0
    %v327 = vadd.f32 %v258, %v326
    %v328 = vpop.f32.mrb[0].mxu0
    %329 = vmatprep.mubr.f32.mxu0 0.0
    %330 = vmatmul.mubr.f32.gmra.mrb[0].mxu0 %v232
    %v331 = vpop.f32.mrb[0].mxu0
    %v332 = vadd.f32 %v258, %v331
    %v333 = vpop.f32.mrb[0].mxu0
    %334 = vdwg.mxu0
    %v335 = vmax.f32 %v327, 0.0
    %v336 = vmax.f32 %v332, 0.0
    %v337 = vld [vmem:[%s7] sm:$0xff]
    %v338 = vld [vmem:[%s7 + $0x8] sm:$0xff]
    %v339 = vld [vmem:[%s7 + $0x10] sm:$0xff]
    %v340 = vld [vmem:[%s7 + $0x18] sm:$0xff]
    %v341 = vld [vmem:[%s7 + $0x20] sm:$0xff]
    %v342 = vld [vmem:[%s7 + $0x28] sm:$0xff]
    %v343 = vld [vmem:[%s7 + $0x30] sm:$0xff]
    %v344 = vld [vmem:[%s7 + $0x38] sm:$0xff]
    %v345 = vld [vmem:[%s7 + $0x40] sm:$0xff]
    %v346 = vld [vmem:[%s7 + $0x48] sm:$0xff]
    %v347 = vld [vmem:[%s7 + $0x50] sm:$0xff]
    %v348 = vld [vmem:[%s7 + $0x58] sm:$0xff]
    %v349 = vld [vmem:[%s7 + $0x60] sm:$0xff]
    %v350 = vld [vmem:[%s7 + $0x68] sm:$0xff]
    %v351 = vld [vmem:[%s7 + $0x70] sm:$0xff]
    %v352 = vld [vmem:[%s7 + $0x78] sm:$0xff]
    %v353 = vld [vmem:[%s8] sm:$0x1]
    %v355 = vlaneseq
    %v356 = vshrl.u32 %v355, 7
    %v357 = vsub.s32 0, %v356
    %v358 = vrot.slane %v353, %v357
    %360 = vmatprep.subr.mxu0 0.0
    %361 = vmatpush1.msra.mxu0 %v337
    %362 = vmatprep.subr.mxu0 0.0
    %363 = vmatpush1.msra.mxu0 %v338
    %364 = vmatprep.subr.mxu0 0.0
    %365 = vmatpush1.msra.mxu0 %v339
    %366 = vmatprep.subr.mxu0 0.0
    %367 = vmatpush1.msra.mxu0 %v340
    %368 = vmatprep.subr.mxu0 0.0
    %369 = vmatpush1.msra.mxu0 %v341
    %370 = vmatprep.subr.mxu0 0.0
    %371 = vmatpush1.msra.mxu0 %v342
    %372 = vmatprep.subr.mxu0 0.0
    %373 = vmatpush1.msra.mxu0 %v343
    %374 = vmatprep.subr.mxu0 0.0
    %375 = vmatpush1.msra.mxu0 %v344
    %376 = vmatprep.subr.mxu0 0.0
    %377 = vmatpush1.msra.mxu0 %v345
    %378 = vmatprep.subr.mxu0 0.0
    %379 = vmatpush1.msra.mxu0 %v346
    %380 = vmatprep.subr.mxu0 0.0
    %381 = vmatpush1.msra.mxu0 %v347
    %382 = vmatprep.subr.mxu0 0.0
    %383 = vmatpush1.msra.mxu0 %v348
    %384 = vmatprep.subr.mxu0 0.0
    %385 = vmatpush1.msra.mxu0 %v349
    %386 = vmatprep.subr.mxu0 0.0
    %387 = vmatpush1.msra.mxu0 %v350
    %388 = vmatprep.subr.mxu0 0.0
    %389 = vmatpush1.msra.mxu0 %v351
    %390 = vmatprep.subr.mxu0 0.0
    %391 = vmatpush1.msra.mxu0 %v352
    %392 = vmatprep.subr.mxu0 0.0
    %393 = vmatpush1.msra.mxu0 0.0
    %394 = vmatprep.subr.mxu0 0.0
    %395 = vmatpush1.msra.mxu0 0.0
    %396 = vmatprep.subr.mxu0 0.0
    %397 = vmatpush1.msra.mxu0 0.0
    %398 = vmatprep.subr.mxu0 0.0
    %399 = vmatpush1.msra.mxu0 0.0
    %400 = vmatprep.subr.mxu0 0.0
    %401 = vmatpush1.msra.mxu0 0.0
    %402 = vmatprep.subr.mxu0 0.0
    %403 = vmatpush1.msra.mxu0 0.0
    %404 = vmatprep.subr.mxu0 0.0
    %405 = vmatpush1.msra.mxu0 0.0
    %406 = vmatprep.subr.mxu0 0.0
    %407 = vmatpush1.msra.mxu0 0.0
    %408 = vmatprep.subr.mxu0 0.0
    %409 = vmatpush1.msra.mxu0 0.0
    %410 = vmatprep.subr.mxu0 0.0
    %411 = vmatpush1.msra.mxu0 0.0
    %412 = vmatprep.subr.mxu0 0.0
    %413 = vmatpush1.msra.mxu0 0.0
    %414 = vmatprep.subr.mxu0 0.0
    %415 = vmatpush1.msra.mxu0 0.0
    %416 = vmatprep.subr.mxu0 0.0
    %417 = vmatpush1.msra.mxu0 0.0
    %418 = vmatprep.subr.mxu0 0.0
    %419 = vmatpush1.msra.mxu0 0.0
    %420 = vmatprep.subr.mxu0 0.0
    %421 = vmatpush1.msra.mxu0 0.0
    %422 = vmatprep.subr.mxu0 0.0
    %423 = vmatpush1.msra.mxu0 0.0
    %424 = vmatprep.mubr.f32.mxu0 0.0
    %425 = vmatmul.mubr.f32.gmra.mrb[0].mxu0 %v335
    %v426 = vpop.f32.mrb[0].mxu0
    %v427 = vadd.f32 %v358, %v426
    %v428 = vpop.f32.mrb[0].mxu0
    %429 = vmatprep.mubr.f32.mxu0 0.0
    %430 = vmatmul.mubr.f32.gmra.mrb[0].mxu0 %v336
    %v431 = vpop.f32.mrb[0].mxu0
    %v432 = vadd.f32 %v358, %v431
    %v433 = vpop.f32.mrb[0].mxu0
    %434 = vdwg.mxu0
    %435 = vst [vmem:[#allocation2] sm:$0xff] %v427
    %436 = vst [vmem:[#allocation2 + $0x8] sm:$0xff] %v432
    // Predicated region
    $region38: #{autoencoder_forward.1} parent=1 // pred_check
      _
    $region39: #{autoencoder_forward.1} parent=1 // pred_check_branch
      %438 = sbr.rel (0) target = $region41
    $region40: #{autoencoder_forward.1} parent=1 // pred_region
      _
    $region41: #{autoencoder_forward.1} parent=1 // pred_fallthru
      _
    // Predicated region
    $region42: #{autoencoder_forward.1} parent=1 // pred_check
      _
    $region43: #{autoencoder_forward.1} parent=1 // pred_check_branch
      %440 = sbr.rel (0) target = $region45
    $region44: #{autoencoder_forward.1} parent=1 // pred_region
      %s442 = ssub.s32 256, 256
      %443 = vsyncadd [#allocation3], %s442
      %s444 = sshll.u32 [#allocation2], 4
      %s445 = int_to_ptr.vmem [resolvable:$true] %s444
      %450 = dma.vmem_to_hbm [thread:$0]  %s445, 256, %s10, [#allocation3], 128, 128, 8
    $region45: #{autoencoder_forward.1} parent=1 // pred_fallthru
      _
    // Predicated region
    $region46: #{autoencoder_forward.1} parent=1 // pred_check
      _
    $region47: #{autoencoder_forward.1} parent=1 // pred_check_branch
      %452 = sbr.rel (0) target = $region49
    $region48: #{autoencoder_forward.1} parent=1 // pred_region
      _
    $region49: #{autoencoder_forward.1} parent=1 // pred_fallthru
      _
    // Predicated region
    $region50: #{autoencoder_forward.1} parent=1 // pred_check
      _
    $region51: #{autoencoder_forward.1} parent=1 // pred_check_branch
      %454 = sbr.rel (0) target = $region53
    $region52: #{autoencoder_forward.1} parent=1 // pred_region
      %455 = dma.done [#allocation3], 256
    $region53: #{autoencoder_forward.1} parent=1 // pred_fallthru
      _
    %456 = vsyncpa [#allocation3], 1

</llo_original>
